<compile_context>
chip_gen: v7x
topology: tpu7x:2x2x1
jax: 0.10.0
libtpu: 0.0.40
codegen_flags: <defaults>
</compile_context>

<pallas_src>
import functools

import jax
import jax.numpy as jnp
from jax import lax
from jax.experimental import pallas as pl
from jax.experimental.pallas import tpu as pltpu


def _se_conv_bn_kernel(x_ref, g_ref, w_ref, gamma_ref, beta_ref, o_ref, *,
                       eps, m_valid):
    # --- SE gating (VPU elementwise + EUP sigmoid) ---
    # gate has 1 on the sublane axis -> broadcast over HW is stride-0, free.
    x = x_ref[...]                           # (N, HWp, Cin) f32
    g = jax.nn.sigmoid(g_ref[...])           # (N, 1,   Cin) f32
    y = x * g                                # (N, HWp, Cin) f32

    # --- flatten to one big 2-D matmul for the MXU ---
    # Merge leading dims while still f32 (HWp % 8 == 0 -> layout-free merge),
    # then cast to bf16 for the MXU; accumulate in f32.
    n, hwp, cin = x_ref.shape
    y2 = y.reshape(n * hwp, cin).astype(jnp.bfloat16)        # (M, Cin) bf16
    z = jnp.dot(y2, w_ref[...],
                preferred_element_type=jnp.float32)          # (M, Cout) f32

    # --- BatchNorm2d (training mode), one-pass batch statistics ---
    # Padded rows of x are exactly zero -> their z rows are exactly zero ->
    # they contribute nothing to sum / sum-of-squares; divide by m_valid.
    s = jnp.sum(z, axis=0, keepdims=True)                    # (1, Cout)
    ss = jnp.sum(z * z, axis=0, keepdims=True)               # (1, Cout)
    inv_m = 1.0 / m_valid
    mean = s * inv_m
    var = ss * inv_m - mean * mean                           # biased variance

    # Fused affine: o = z * scale + shift (2 ops/elem instead of 4).
    scale = gamma_ref[...] * lax.rsqrt(var + eps)            # (1, Cout)
    shift = beta_ref[...] - mean * scale                     # (1, Cout)
    o_ref[...] = z * scale + shift


def se_conv_bn(x_nchw, gate_nc11, w_oihw, gamma, beta, *, eps=1e-3):
    """NCHW in -> NCHW out; fused SE-gate + 1x1 conv + BN in one Pallas kernel."""
    N, Cin, H, W = x_nchw.shape
    Cout = w_oihw.shape[0]
    HW = H * W
    HWp = ((HW + 7) // 8) * 8   # pad spatial rows to an f32 sublane multiple

    # Layout plumbing (plain JAX glue).
    x = jnp.transpose(x_nchw, (0, 2, 3, 1)).reshape(N, HW, Cin)     # (N, HW, Cin)
    if HWp != HW:
        x = jnp.pad(x, ((0, 0), (0, HWp - HW), (0, 0)))             # zero-pad rows
    g = gate_nc11.reshape(N, 1, Cin).astype(jnp.float32)            # (N, 1, Cin)
    wmat = jnp.transpose(w_oihw.reshape(Cout, Cin), (1, 0)).astype(jnp.bfloat16)
    gamma2 = gamma.reshape(1, Cout).astype(jnp.float32)
    beta2 = beta.reshape(1, Cout).astype(jnp.float32)

    kernel = functools.partial(
        _se_conv_bn_kernel, eps=float(eps), m_valid=float(N * HW))

    out = pl.pallas_call(
        kernel,
        out_shape=jax.ShapeDtypeStruct((N * HWp, Cout), jnp.float32),
        in_specs=[
            pl.BlockSpec(memory_space=pltpu.MemorySpace.VMEM),  # x
            pl.BlockSpec(memory_space=pltpu.MemorySpace.VMEM),  # gate
            pl.BlockSpec(memory_space=pltpu.MemorySpace.VMEM),  # weight (bf16)
            pl.BlockSpec(memory_space=pltpu.MemorySpace.VMEM),  # gamma
            pl.BlockSpec(memory_space=pltpu.MemorySpace.VMEM),  # beta
        ],
        out_specs=pl.BlockSpec(memory_space=pltpu.MemorySpace.VMEM),
    )(x, g, wmat, gamma2, beta2)

    # Drop padded rows, back to NCHW.
    out = out.reshape(N, HWp, Cout)[:, :HW, :].reshape(N, H, W, Cout)
    return jnp.transpose(out, (0, 3, 1, 2))


def _reference(x_nchw, gate_nc11, w_oihw, gamma, beta, eps=1e-3):
    """Plain-JAX f32 reference reproducing the PyTorch forward (training-mode BN)."""
    y = jax.nn.sigmoid(gate_nc11) * x_nchw                          # (N, Cin, H, W)
    N, Cin, H, W = y.shape
    Cout = w_oihw.shape[0]
    z = jnp.einsum("nchw,oc->nohw", y, w_oihw.reshape(Cout, Cin))
    mean = jnp.mean(z, axis=(0, 2, 3), keepdims=True)
    var = jnp.mean((z - mean) ** 2, axis=(0, 2, 3), keepdims=True)  # biased
    zn = (z - mean) / jnp.sqrt(var + eps)
    return zn * gamma.reshape(1, Cout, 1, 1) + beta.reshape(1, Cout, 1, 1)


if __name__ == "__main__":
    # Original module: Cin=2304, Cout=384, N=1, H=W=7.
    # Small-but-consistent shapes (H=W=7 kept to exercise the sublane-pad path).
    N, Cin, Cout, H, W = 2, 256, 128, 7, 7

    key = jax.random.PRNGKey(0)
    k1, k2, k3, k4, k5 = jax.random.split(key, 5)

    x597 = jax.random.normal(k1, (N, Cin, H, W), dtype=jnp.float32)   # feature map
    x601 = jax.random.normal(k2, (N, Cin, 1, 1), dtype=jnp.float32)   # SE gate input

    # Deterministic synthetic parameter init.
    conv_w = jax.random.normal(k3, (Cout, Cin, 1, 1), dtype=jnp.float32) * 0.02
    bn_gamma = 1.0 + 0.1 * jax.random.normal(k4, (Cout,), dtype=jnp.float32)
    bn_beta = 0.1 * jax.random.normal(k5, (Cout,), dtype=jnp.float32)

    out = se_conv_bn(x597, x601, conv_w, bn_gamma, bn_beta, eps=1e-3)
    out = jax.block_until_ready(out)

    ref = _reference(x597, x601, conv_w, bn_gamma, bn_beta, eps=1e-3)
    assert out.shape == (N, Cout, H, W), out.shape
    # bf16 MXU feed (f32 accumulation) -> tolerance appropriate for bf16 inputs.
    assert jnp.allclose(out, ref, atol=5e-2, rtol=5e-2), float(
        jnp.max(jnp.abs(out - ref))
    )

    print("KERNEL_OK")
</pallas_src>

<mosaic_0001>
module attributes {stable_mosaic.version = 11 : i64} {
  func.func @_se_conv_bn_kernel(%arg0: memref<2x56x256xf32, #tpu.memory_space<vmem>>, %arg1: memref<2x1x256xf32, #tpu.memory_space<vmem>>, %arg2: memref<256x128xbf16, #tpu.memory_space<vmem>>, %arg3: memref<1x128xf32, #tpu.memory_space<vmem>>, %arg4: memref<1x128xf32, #tpu.memory_space<vmem>>, %arg5: memref<112x128xf32, #tpu.memory_space<vmem>>) attributes {dimension_semantics = [], scalar_prefetch = 0 : i64, scratch_operands = 0 : i64, tpu.core_type = #tpu.core_type<tc>} {
    %c0 = arith.constant 0 : index
    %c0_0 = arith.constant 0 : index
    %c0_1 = arith.constant 0 : index
    %0 = vector.load %arg0[%c0, %c0_0, %c0_1] : memref<2x56x256xf32, #tpu.memory_space<vmem>>, vector<2x56x256xf32>
    %c0_2 = arith.constant 0 : index
    %c0_3 = arith.constant 0 : index
    %c0_4 = arith.constant 0 : index
    %1 = vector.load %arg1[%c0_2, %c0_3, %c0_4] : memref<2x1x256xf32, #tpu.memory_space<vmem>>, vector<2x1x256xf32>
    %2 = arith.negf %1 : vector<2x1x256xf32>
    %3 = math.exp %2 : vector<2x1x256xf32>
    %cst = arith.constant 1.000000e+00 : f32
    %4 = vector.broadcast %cst : f32 to vector<2x1x256xf32>
    %5 = arith.addf %4, %3 : vector<2x1x256xf32>
    %6 = arith.divf %4, %5 : vector<2x1x256xf32>
    %7 = vector.broadcast %6 : vector<2x1x256xf32> to vector<2x56x256xf32>
    %8 = arith.mulf %0, %7 : vector<2x56x256xf32>
    %9 = vector.shape_cast %8 : vector<2x56x256xf32> to vector<112x256xf32>
    %10 = arith.truncf %9 : vector<112x256xf32> to vector<112x256xbf16>
    %c0_5 = arith.constant 0 : index
    %c0_6 = arith.constant 0 : index
    %11 = vector.load %arg2[%c0_5, %c0_6] : memref<256x128xbf16, #tpu.memory_space<vmem>>, vector<256x128xbf16>
    %cst_7 = arith.constant dense<0.000000e+00> : vector<112x128xf32>
    %12 = tpu.matmul %10, %11, %cst_7 {dimension_numbers = #tpu.dot_dimension_numbers<[1], [0], [0], [1], [0, 0, 1, 1], [], []>} : vector<112x256xbf16>, vector<256x128xbf16>, vector<112x128xf32> -> vector<112x128xf32>
    %cst_8 = arith.constant dense<0.000000e+00> : vector<128xf32>
    %13 = vector.multi_reduction <add>, %12, %cst_8 [0] : vector<112x128xf32> to vector<128xf32>
    %14 = vector.shape_cast %13 : vector<128xf32> to vector<1x128xf32>
    %15 = arith.mulf %12, %12 : vector<112x128xf32>
    %cst_9 = arith.constant dense<0.000000e+00> : vector<128xf32>
    %16 = vector.multi_reduction <add>, %15, %cst_9 [0] : vector<112x128xf32> to vector<128xf32>
    %17 = vector.shape_cast %16 : vector<128xf32> to vector<1x128xf32>
    %cst_10 = arith.constant 0.0102040814 : f32
    %18 = vector.broadcast %cst_10 : f32 to vector<1x128xf32>
    %19 = arith.mulf %14, %18 : vector<1x128xf32>
    %cst_11 = arith.constant 0.0102040814 : f32
    %20 = vector.broadcast %cst_11 : f32 to vector<1x128xf32>
    %21 = arith.mulf %17, %20 : vector<1x128xf32>
    %22 = arith.mulf %19, %19 : vector<1x128xf32>
    %23 = arith.subf %21, %22 : vector<1x128xf32>
    %c0_12 = arith.constant 0 : index
    %c0_13 = arith.constant 0 : index
    %24 = vector.load %arg3[%c0_12, %c0_13] : memref<1x128xf32, #tpu.memory_space<vmem>>, vector<1x128xf32>
    %cst_14 = arith.constant 1.000000e-03 : f32
    %25 = vector.broadcast %cst_14 : f32 to vector<1x128xf32>
    %26 = arith.addf %23, %25 : vector<1x128xf32>
    %27 = math.rsqrt %26 : vector<1x128xf32>
    %28 = arith.mulf %24, %27 : vector<1x128xf32>
    %c0_15 = arith.constant 0 : index
    %c0_16 = arith.constant 0 : index
    %29 = vector.load %arg4[%c0_15, %c0_16] : memref<1x128xf32, #tpu.memory_space<vmem>>, vector<1x128xf32>
    %30 = arith.mulf %19, %28 : vector<1x128xf32>
    %31 = arith.subf %29, %30 : vector<1x128xf32>
    %32 = vector.broadcast %28 : vector<1x128xf32> to vector<112x128xf32>
    %33 = arith.mulf %12, %32 : vector<112x128xf32>
    %34 = vector.broadcast %31 : vector<1x128xf32> to vector<112x128xf32>
    %35 = arith.addf %33, %34 : vector<112x128xf32>
    %c0_17 = arith.constant 0 : index
    %c0_18 = arith.constant 0 : index
    %36 = vector.load %arg5[%c0_17, %c0_18] : memref<112x128xf32, #tpu.memory_space<vmem>>, vector<112x128xf32>
    tpu.vector_store %arg5[%c0_17, %c0_18], %35 {strides = array<i32>} : memref<112x128xf32, #tpu.memory_space<vmem>>, vector<112x128xf32>,
    return
  }
}

</mosaic_0001>

<llo_original>
// kernel: tpu_custom_call.1
$region0: #{tpu_custom_call.1}
  #allocation0 [shape = 'u32[]', space=smem, size = 0x4, offset = 0x4, fixed_abs, tag = 'smem constant byte address 0x4 - core index']
  #allocation1 [shape = 'u32[144,128]{1,0:T(1,128)}', space=vmem, size = 0x12000, scoped, tag = 'internal scratch']
  %s0 = inlined_call_operand.hbm [shape: f32[2,56,256], index: 0, kind: input, shape index: {}]
  %s1 = inlined_call_operand.hbm [shape: f32[2,1,256], index: 1, kind: input, shape index: {}]
  %s2 = inlined_call_operand.hbm [shape: bf16[256,128], index: 2, kind: input, shape index: {}]
  %s3 = inlined_call_operand.vmem [shape: f32[1,128], index: 3, kind: input, shape index: {}]
  %s4 = inlined_call_operand.vmem [shape: f32[1,128], index: 4, kind: input, shape index: {}]
  %s5 = inlined_call_operand.hbm [shape: f32[112,128], index: 5, kind: output, shape index: {}]
  %s6 = sld [smem:[#allocation0]]
  $region42: #{tpu_custom_call.1} parent=0
    _
  %s8 = ssub.s32 1, %s6
  %s9 = scalar_select 0, %s8, %s6
  $region1: #{tpu_custom_call.1} parent=0
    #allocation2 [shape = 'u8[114688]{0}', space=vmem, size = 0x1c000, scoped, tag = 'input window, operand 0, single buffered']
    #allocation3 [shape = 's32[1]{0}', space=sflag, size = 0x4, scoped, tag = 'scoped memory for tpu_custom_call.1']
    #allocation4 [shape = 's32[1]{0}', space=sflag, size = 0x4, scoped, tag = 'scoped memory for tpu_custom_call.1']
    #allocation5 [shape = 'u8[2048]{0}', space=vmem, size = 0x800, scoped, tag = 'input window, operand 1, single buffered']
    #allocation6 [shape = 's32[1]{0}', space=sflag, size = 0x4, scoped, tag = 'scoped memory for tpu_custom_call.1']
    #allocation7 [shape = 'u8[65536]{0}', space=vmem, size = 0x10000, scoped, tag = 'input window, operand 2, single buffered']
    #allocation8 [shape = 'u8[57344]{0}', space=vmem, size = 0xe000, scoped, tag = 'output window, operand 0, single buffered']
    %10 = vsyncpa [#allocation3], 0
    %11 = vsyncpa [#allocation6], 0
    %12 = vsyncpa [#allocation4], 0
    // Predicated region
    $region2: #{tpu_custom_call.1} parent=1 // pred_check
      _
    $region3: #{tpu_custom_call.1} parent=1 // pred_check_branch
      %14 = sbr.rel (0) target = $region5
    $region4: #{tpu_custom_call.1} parent=1 // pred_region
      %s16 = ssub.s32 3584, 3584
      %17 = vsyncadd [#allocation3], %s16
      %s18 = sshll.u32 [#allocation2], 4
      %s19 = int_to_ptr.vmem [resolvable:$true] %s18
      %24 = dma.hbm_to_vmem [thread:$0]  %s0, 3584, %s19, [#allocation3], 256, 256, 16
    $region5: #{tpu_custom_call.1} parent=1 // pred_fallthru
      _
    // Predicated region
    $region6: #{tpu_custom_call.1} parent=1 // pred_check
      _
    $region7: #{tpu_custom_call.1} parent=1 // pred_check_branch
      %26 = sbr.rel (0) target = $region9
    $region8: #{tpu_custom_call.1} parent=1 // pred_region
      %s28 = ssub.s32 64, 64
      %29 = vsyncadd [#allocation6], %s28
      %s30 = sshll.u32 [#allocation5], 4
      %s31 = int_to_ptr.vmem [resolvable:$true] %s30
      %36 = dma.hbm_to_vmem [thread:$0]  %s1, 64, %s31, [#allocation6], 32, 32, 2
    $region9: #{tpu_custom_call.1} parent=1 // pred_fallthru
      _
    // Predicated region
    $region10: #{tpu_custom_call.1} parent=1 // pred_check
      _
    $region11: #{tpu_custom_call.1} parent=1 // pred_check_branch
      %38 = sbr.rel (0) target = $region13
    $region12: #{tpu_custom_call.1} parent=1 // pred_region
      %s40 = ssub.s32 2048, 2048
      %41 = vsyncadd [#allocation6], %s40
      %s42 = sshll.u32 [#allocation7], 4
      %s43 = int_to_ptr.vmem [resolvable:$true] %s42
      %48 = dma.hbm_to_vmem [thread:$0]  %s2, 2048, %s43, [#allocation6], 64, 64, 4
    $region13: #{tpu_custom_call.1} parent=1 // pred_fallthru
      _
    // Predicated region
    $region14: #{tpu_custom_call.1} parent=1 // pred_check
      _
    $region15: #{tpu_custom_call.1} parent=1 // pred_check_branch
      %50 = sbr.rel (0) target = $region17
    $region16: #{tpu_custom_call.1} parent=1 // pred_region
      _
    $region17: #{tpu_custom_call.1} parent=1 // pred_fallthru
      _
    // Predicated region
    $region18: #{tpu_custom_call.1} parent=1 // pred_check
      _
    $region19: #{tpu_custom_call.1} parent=1 // pred_check_branch
      %52 = sbr.rel (0) target = $region21
    $region20: #{tpu_custom_call.1} parent=1 // pred_region
      _
    $region21: #{tpu_custom_call.1} parent=1 // pred_fallthru
      _
    // Predicated region
    $region22: #{tpu_custom_call.1} parent=1 // pred_check
      _
    $region23: #{tpu_custom_call.1} parent=1 // pred_check_branch
      %54 = sbr.rel (0) target = $region25
    $region24: #{tpu_custom_call.1} parent=1 // pred_region
      %55 = dma.done [#allocation3], 3584
    $region25: #{tpu_custom_call.1} parent=1 // pred_fallthru
      _
    // Predicated region
    $region26: #{tpu_custom_call.1} parent=1 // pred_check
      _
    $region27: #{tpu_custom_call.1} parent=1 // pred_check_branch
      %57 = sbr.rel (0) target = $region29
    $region28: #{tpu_custom_call.1} parent=1 // pred_region
      %58 = dma.done [#allocation6], 64
    $region29: #{tpu_custom_call.1} parent=1 // pred_fallthru
      _
    // Predicated region
    $region30: #{tpu_custom_call.1} parent=1 // pred_check
      _
    $region31: #{tpu_custom_call.1} parent=1 // pred_check_branch
      %60 = sbr.rel (0) target = $region33
    $region32: #{tpu_custom_call.1} parent=1 // pred_region
      %61 = dma.done [#allocation6], 2048
    $region33: #{tpu_custom_call.1} parent=1 // pred_fallthru
      _
    %v63 = vld [vmem:[#allocation2] sm:$0xff]
    %v64 = vld [vmem:[#allocation2 + $0x8] sm:$0xff]
    %v65 = vld [vmem:[#allocation2 + $0x10] sm:$0xff]
    %v66 = vld [vmem:[#allocation2 + $0x18] sm:$0xff]
    %v67 = vld [vmem:[#allocation2 + $0x20] sm:$0xff]
    %v68 = vld [vmem:[#allocation2 + $0x28] sm:$0xff]
    %v69 = vld [vmem:[#allocation2 + $0x30] sm:$0xff]
    %v70 = vld [vmem:[#allocation2 + $0x38] sm:$0xff]
    %v71 = vld [vmem:[#allocation2 + $0x40] sm:$0xff]
    %v72 = vld [vmem:[#allocation2 + $0x48] sm:$0xff]
    %v73 = vld [vmem:[#allocation2 + $0x50] sm:$0xff]
    %v74 = vld [vmem:[#allocation2 + $0x58] sm:$0xff]
    %v75 = vld [vmem:[#allocation2 + $0x60] sm:$0xff]
    %v76 = vld [vmem:[#allocation2 + $0x68] sm:$0xff]
    %v77 = vld [vmem:[#allocation2 + $0x70] sm:$0xff]
    %v78 = vld [vmem:[#allocation2 + $0x78] sm:$0xff]
    %v79 = vld [vmem:[#allocation2 + $0x80] sm:$0xff]
    %v80 = vld [vmem:[#allocation2 + $0x88] sm:$0xff]
    %v81 = vld [vmem:[#allocation2 + $0x90] sm:$0xff]
    %v82 = vld [vmem:[#allocation2 + $0x98] sm:$0xff]
    %v83 = vld [vmem:[#allocation2 + $0xa0] sm:$0xff]
    %v84 = vld [vmem:[#allocation2 + $0xa8] sm:$0xff]
    %v85 = vld [vmem:[#allocation2 + $0xb0] sm:$0xff]
    %v86 = vld [vmem:[#allocation2 + $0xb8] sm:$0xff]
    %v87 = vld [vmem:[#allocation2 + $0xc0] sm:$0xff]
    %v88 = vld [vmem:[#allocation2 + $0xc8] sm:$0xff]
    %v89 = vld [vmem:[#allocation2 + $0xd0] sm:$0xff]
    %v90 = vld [vmem:[#allocation2 + $0xd8] sm:$0xff]
    %v91 = vld [vmem:[#allocation5] sm:$0x3]
    %v92 = vld [vmem:[#allocation5 + $0x2] sm:$0x3]
    %v93 = vxor.u32 %v91, 2147483648
    %v94 = vxor.u32 %v92, 2147483648
    %v95 = vmul.f32 %v93, 1.442695
    %v96 = vpow.pop %v95
    %v97 = vmul.f32 %v94, 1.442695
    %v98 = vpow.pop %v97
    %v99 = vadd.f32 %v96, 1.0
    %v100 = vadd.f32 %v98, 1.0
    %v101 = vrcp.pop %v99
    %v102 = vmul.f32 1.0, %v101
    %v103 = vrcp.pop %v100
    %v104 = vmul.f32 1.0, %v103
    %v107 = vlaneseq
    %v108 = vshrl.u32 %v107, 7
    %v109 = vsub.s32 0, %v108
    %v110 = vrot.slane %v102, %v109
    %v111 = vlaneseq
    %v112 = vshrl.u32 %v111, 7
    %v113 = vsub.s32 1, %v112
    %v114 = vrot.slane %v102, %v113
    %v115 = vlaneseq
    %v116 = vshrl.u32 %v115, 7
    %v117 = vsub.s32 0, %v116
    %v118 = vrot.slane %v104, %v117
    %v119 = vlaneseq
    %v120 = vshrl.u32 %v119, 7
    %v121 = vsub.s32 1, %v120
    %v122 = vrot.slane %v104, %v121
    %v127 = vmul.f32 %v63, %v110
    %v128 = vmul.f32 %v64, %v114
    %v129 = vmul.f32 %v65, %v110
    %v130 = vmul.f32 %v66, %v114
    %v131 = vmul.f32 %v67, %v110
    %v132 = vmul.f32 %v68, %v114
    %v133 = vmul.f32 %v69, %v110
    %v134 = vmul.f32 %v70, %v114
    %v135 = vmul.f32 %v71, %v110
    %v136 = vmul.f32 %v72, %v114
    %v137 = vmul.f32 %v73, %v110
    %v138 = vmul.f32 %v74, %v114
    %v139 = vmul.f32 %v75, %v110
    %v140 = vmul.f32 %v76, %v114
    %v141 = vmul.f32 %v77, %v118
    %v142 = vmul.f32 %v78, %v122
    %v143 = vmul.f32 %v79, %v118
    %v144 = vmul.f32 %v80, %v122
    %v145 = vmul.f32 %v81, %v118
    %v146 = vmul.f32 %v82, %v122
    %v147 = vmul.f32 %v83, %v118
    %v148 = vmul.f32 %v84, %v122
    %v149 = vmul.f32 %v85, %v118
    %v150 = vmul.f32 %v86, %v122
    %v151 = vmul.f32 %v87, %v118
    %v152 = vmul.f32 %v88, %v122
    %v153 = vmul.f32 %v89, %v118
    %v154 = vmul.f32 %v90, %v122
    %v155 = vpack.c.bf16 %v129, %v127
    %v156 = vpack.c.bf16 %v130, %v128
    %v157 = vpack.c.bf16 %v133, %v131
    %v158 = vpack.c.bf16 %v134, %v132
    %v159 = vpack.c.bf16 %v137, %v135
    %v160 = vpack.c.bf16 %v138, %v136
    %v161 = vpack.c.bf16 %v141, %v139
    %v162 = vpack.c.bf16 %v142, %v140
    %v163 = vpack.c.bf16 %v145, %v143
    %v164 = vpack.c.bf16 %v146, %v144
    %v165 = vpack.c.bf16 %v149, %v147
    %v166 = vpack.c.bf16 %v150, %v148
    %v167 = vpack.c.bf16 %v153, %v151
    %v168 = vpack.c.bf16 %v154, %v152
    %v169 = vld [vmem:[#allocation7] sm:$0xf]
    %v170 = vld [vmem:[#allocation7 + $0x4] sm:$0xf]
    %v171 = vld [vmem:[#allocation7 + $0x8] sm:$0xf]
    %v172 = vld [vmem:[#allocation7 + $0xc] sm:$0xf]
    %v173 = vld [vmem:[#allocation7 + $0x10] sm:$0xf]
    %v174 = vld [vmem:[#allocation7 + $0x14] sm:$0xf]
    %v175 = vld [vmem:[#allocation7 + $0x18] sm:$0xf]
    %v176 = vld [vmem:[#allocation7 + $0x1c] sm:$0xf]
    %v177 = vld [vmem:[#allocation7 + $0x20] sm:$0xf]
    %v178 = vld [vmem:[#allocation7 + $0x24] sm:$0xf]
    %v179 = vld [vmem:[#allocation7 + $0x28] sm:$0xf]
    %v180 = vld [vmem:[#allocation7 + $0x2c] sm:$0xf]
    %v181 = vld [vmem:[#allocation7 + $0x30] sm:$0xf]
    %v182 = vld [vmem:[#allocation7 + $0x34] sm:$0xf]
    %v183 = vld [vmem:[#allocation7 + $0x38] sm:$0xf]
    %v184 = vld [vmem:[#allocation7 + $0x3c] sm:$0xf]
    %v185 = vld [vmem:[#allocation7 + $0x40] sm:$0xf]
    %v186 = vld [vmem:[#allocation7 + $0x44] sm:$0xf]
    %v187 = vld [vmem:[#allocation7 + $0x48] sm:$0xf]
    %v188 = vld [vmem:[#allocation7 + $0x4c] sm:$0xf]
    %v189 = vld [vmem:[#allocation7 + $0x50] sm:$0xf]
    %v190 = vld [vmem:[#allocation7 + $0x54] sm:$0xf]
    %v191 = vld [vmem:[#allocation7 + $0x58] sm:$0xf]
    %v192 = vld [vmem:[#allocation7 + $0x5c] sm:$0xf]
    %v193 = vld [vmem:[#allocation7 + $0x60] sm:$0xf]
    %v194 = vld [vmem:[#allocation7 + $0x64] sm:$0xf]
    %v195 = vld [vmem:[#allocation7 + $0x68] sm:$0xf]
    %v196 = vld [vmem:[#allocation7 + $0x6c] sm:$0xf]
    %v197 = vld [vmem:[#allocation7 + $0x70] sm:$0xf]
    %v198 = vld [vmem:[#allocation7 + $0x74] sm:$0xf]
    %v199 = vld [vmem:[#allocation7 + $0x78] sm:$0xf]
    %v200 = vld [vmem:[#allocation7 + $0x7c] sm:$0xf]
    %v233 = vunpack.c.l.b16 %v169
    %v234 = vunpack.c.l.b16 %v170
    %v235 = vunpack.c.l.b16 %v171
    %v236 = vunpack.c.l.b16 %v172
    %v237 = vunpack.c.l.b16 %v173
    %v238 = vunpack.c.l.b16 %v174
    %v239 = vunpack.c.l.b16 %v175
    %v240 = vunpack.c.l.b16 %v176
    %v241 = vunpack.c.l.b16 %v177
    %v242 = vunpack.c.l.b16 %v178
    %v243 = vunpack.c.l.b16 %v179
    %v244 = vunpack.c.l.b16 %v180
    %v245 = vunpack.c.l.b16 %v181
    %v246 = vunpack.c.l.b16 %v182
    %v247 = vunpack.c.l.b16 %v183
    %v248 = vunpack.c.l.b16 %v184
    %v249 = vunpack.c.l.b16 %v185
    %v250 = vunpack.c.l.b16 %v186
    %v251 = vunpack.c.l.b16 %v187
    %v252 = vunpack.c.l.b16 %v188
    %v253 = vunpack.c.l.b16 %v189
    %v254 = vunpack.c.l.b16 %v190
    %v255 = vunpack.c.l.b16 %v191
    %v256 = vunpack.c.l.b16 %v192
    %v257 = vunpack.c.l.b16 %v193
    %v258 = vunpack.c.l.b16 %v194
    %v259 = vunpack.c.l.b16 %v195
    %v260 = vunpack.c.l.b16 %v196
    %v261 = vunpack.c.l.b16 %v197
    %v262 = vunpack.c.l.b16 %v198
    %v263 = vunpack.c.l.b16 %v199
    %v264 = vunpack.c.l.b16 %v200
    %v265 = vpack.c.b16 %v234, %v233
    %v266 = vpack.c.b16 %v236, %v235
    %v267 = vpack.c.b16 %v238, %v237
    %v268 = vpack.c.b16 %v240, %v239
    %v269 = vpack.c.b16 %v242, %v241
    %v270 = vpack.c.b16 %v244, %v243
    %v271 = vpack.c.b16 %v246, %v245
    %v272 = vpack.c.b16 %v248, %v247
    %v273 = vpack.c.b16 %v250, %v249
    %v274 = vpack.c.b16 %v252, %v251
    %v275 = vpack.c.b16 %v254, %v253
    %v276 = vpack.c.b16 %v256, %v255
    %v277 = vpack.c.b16 %v258, %v257
    %v278 = vpack.c.b16 %v260, %v259
    %v279 = vpack.c.b16 %v262, %v261
    %v280 = vpack.c.b16 %v264, %v263
    %297 = vmatprep.subr.bf16.mxu0 0
    %298 = vmatpush1.bf16.msra.mxu0 %v265
    %299 = vmatprep.subr.bf16.mxu0 0
    %300 = vmatpush1.bf16.msra.mxu0 %v266
    %301 = vmatprep.subr.bf16.mxu0 0
    %302 = vmatpush1.bf16.msra.mxu0 %v267
    %303 = vmatprep.subr.bf16.mxu0 0
    %304 = vmatpush1.bf16.msra.mxu0 %v268
    %305 = vmatprep.subr.bf16.mxu0 0
    %306 = vmatpush1.bf16.msra.mxu0 %v269
    %307 = vmatprep.subr.bf16.mxu0 0
    %308 = vmatpush1.bf16.msra.mxu0 %v270
    %309 = vmatprep.subr.bf16.mxu0 0
    %310 = vmatpush1.bf16.msra.mxu0 %v271
    %311 = vmatprep.subr.bf16.mxu0 0
    %312 = vmatpush1.bf16.msra.mxu0 %v272
    %313 = vmatprep.subr.bf16.mxu0 0
    %314 = vmatpush1.bf16.msra.mxu0 %v273
    %315 = vmatprep.subr.bf16.mxu0 0
    %316 = vmatpush1.bf16.msra.mxu0 %v274
    %317 = vmatprep.subr.bf16.mxu0 0
    %318 = vmatpush1.bf16.msra.mxu0 %v275
    %319 = vmatprep.subr.bf16.mxu0 0
    %320 = vmatpush1.bf16.msra.mxu0 %v276
    %321 = vmatprep.subr.bf16.mxu0 0
    %322 = vmatpush1.bf16.msra.mxu0 %v277
    %323 = vmatprep.subr.bf16.mxu0 0
    %324 = vmatpush1.bf16.msra.mxu0 %v278
    %325 = vmatprep.subr.bf16.mxu0 0
    %326 = vmatpush1.bf16.msra.mxu0 %v279
    %327 = vmatprep.subr.bf16.mxu0 0
    %328 = vmatpush1.bf16.msra.mxu0 %v280
    %329 = vmatprep.mubr.bf16.mxu0 %v156
    %330 = vmatmul.mubr.bf16.gmra.mrb[0].mxu0 %v155
    %v331 = vpop.f32.mrb[0].mxu0
    %v332 = vadd.f32 0.0, %v331
    %v333 = vpop.f32.mrb[0].mxu0
    %v334 = vpop.f32.mrb[0].mxu0
    %v335 = vadd.f32 0.0, %v334
    %v336 = vpop.f32.mrb[0].mxu0
    %337 = vmatprep.mubr.bf16.mxu0 %v158
    %338 = vmatmul.mubr.bf16.gmra.mrb[0].mxu0 %v157
    %v339 = vpop.f32.mrb[0].mxu0
    %v340 = vadd.f32 0.0, %v339
    %v341 = vpop.f32.mrb[0].mxu0
    %v342 = vpop.f32.mrb[0].mxu0
    %v343 = vadd.f32 0.0, %v342
    %v344 = vpop.f32.mrb[0].mxu0
    %345 = vmatprep.mubr.bf16.mxu0 %v160
    %346 = vmatmul.mubr.bf16.gmra.mrb[0].mxu0 %v159
    %v347 = vpop.f32.mrb[0].mxu0
    %v348 = vadd.f32 0.0, %v347
    %v349 = vpop.f32.mrb[0].mxu0
    %v350 = vpop.f32.mrb[0].mxu0
    %v351 = vadd.f32 0.0, %v350
    %v352 = vpop.f32.mrb[0].mxu0
    %353 = vmatprep.mubr.bf16.mxu0 %v162
    %354 = vmatmul.mubr.bf16.gmra.mrb[0].mxu0 %v161
    %v355 = vpop.f32.mrb[0].mxu0
    %v356 = vadd.f32 0.0, %v355
    %v357 = vpop.f32.mrb[0].mxu0
    %v358 = vpop.f32.mrb[0].mxu0
    %v359 = vadd.f32 0.0, %v358
    %v360 = vpop.f32.mrb[0].mxu0
    %361 = vmatprep.mubr.bf16.mxu0 %v164
    %362 = vmatmul.mubr.bf16.gmra.mrb[0].mxu0 %v163
    %v363 = vpop.f32.mrb[0].mxu0
    %v364 = vadd.f32 0.0, %v363
    %v365 = vpop.f32.mrb[0].mxu0
    %v366 = vpop.f32.mrb[0].mxu0
    %v367 = vadd.f32 0.0, %v366
    %v368 = vpop.f32.mrb[0].mxu0
    %369 = vmatprep.mubr.bf16.mxu0 %v166
    %370 = vmatmul.mubr.bf16.gmra.mrb[0].mxu0 %v165
    %v371 = vpop.f32.mrb[0].mxu0
    %v372 = vadd.f32 0.0, %v371
    %v373 = vpop.f32.mrb[0].mxu0
    %v374 = vpop.f32.mrb[0].mxu0
    %v375 = vadd.f32 0.0, %v374
    %v376 = vpop.f32.mrb[0].mxu0
    %377 = vmatprep.mubr.bf16.mxu0 %v168
    %378 = vmatmul.mubr.bf16.gmra.mrb[0].mxu0 %v167
    %v379 = vpop.f32.mrb[0].mxu0
    %v380 = vadd.f32 0.0, %v379
    %v381 = vpop.f32.mrb[0].mxu0
    %v382 = vpop.f32.mrb[0].mxu0
    %v383 = vadd.f32 0.0, %v382
    %v384 = vpop.f32.mrb[0].mxu0
    %385 = vdwg.mxu0
    %v386 = vadd.f32 %v332, %v335
    %v387 = vadd.f32 %v386, %v340
    %v388 = vadd.f32 %v387, %v343
    %v389 = vadd.f32 %v388, %v348
    %v390 = vadd.f32 %v389, %v351
    %v391 = vadd.f32 %v390, %v356
    %v392 = vadd.f32 %v391, %v359
    %v393 = vadd.f32 %v392, %v364
    %v394 = vadd.f32 %v393, %v367
    %v395 = vadd.f32 %v394, %v372
    %v396 = vadd.f32 %v395, %v375
    %v397 = vadd.f32 %v396, %v380
    %v398 = vadd.f32 %v397, %v383
    %v399 = vrot.slane %v398, 4
    %v400 = vadd.f32 %v398, %v399
    %v401 = vrot.slane %v400, 2
    %v402 = vadd.f32 %v400, %v401
    %v403 = vrot.slane %v402, 1
    %v404 = vadd.f32 %v402, %v403
    %v405 = vmul.f32 %v332, %v332
    %v406 = vmul.f32 %v335, %v335
    %v407 = vmul.f32 %v340, %v340
    %v408 = vmul.f32 %v343, %v343
    %v409 = vmul.f32 %v348, %v348
    %v410 = vmul.f32 %v351, %v351
    %v411 = vmul.f32 %v356, %v356
    %v412 = vmul.f32 %v359, %v359
    %v413 = vmul.f32 %v364, %v364
    %v414 = vmul.f32 %v367, %v367
    %v415 = vmul.f32 %v372, %v372
    %v416 = vmul.f32 %v375, %v375
    %v417 = vmul.f32 %v380, %v380
    %v418 = vmul.f32 %v383, %v383
    %v419 = vadd.f32 %v405, %v406
    %v420 = vadd.f32 %v419, %v407
    %v421 = vadd.f32 %v420, %v408
    %v422 = vadd.f32 %v421, %v409
    %v423 = vadd.f32 %v422, %v410
    %v424 = vadd.f32 %v423, %v411
    %v425 = vadd.f32 %v424, %v412
    %v426 = vadd.f32 %v425, %v413
    %v427 = vadd.f32 %v426, %v414
    %v428 = vadd.f32 %v427, %v415
    %v429 = vadd.f32 %v428, %v416
    %v430 = vadd.f32 %v429, %v417
    %v431 = vadd.f32 %v430, %v418
    %v432 = vrot.slane %v431, 4
    %v433 = vadd.f32 %v431, %v432
    %v434 = vrot.slane %v433, 2
    %v435 = vadd.f32 %v433, %v434
    %v436 = vrot.slane %v435, 1
    %v437 = vadd.f32 %v435, %v436
    %v438 = vmul.f32 %v404, 0.010204081
    %v439 = vmul.f32 %v437, 0.010204081
    %v440 = vmul.f32 %v438, %v438
    %v441 = vsub.f32 %v439, %v440
    %v442 = vld [vmem:[%s3] sm:$0x1]
    %v443 = vadd.f32 %v441, 0.001
    %v444 = vrsqrt.pop %v443
    %v445 = vmul.f32 %v442, %v444
    %v446 = vld [vmem:[%s4] sm:$0x1]
    %v447 = vmul.f32 %v438, %v445
    %v448 = vsub.f32 %v446, %v447
    %v450 = vlaneseq
    %v451 = vshrl.u32 %v450, 7
    %v452 = vsub.s32 0, %v451
    %v453 = vrot.slane %v445, %v452
    %v455 = vmul.f32 %v332, %v453
    %v456 = vmul.f32 %v335, %v453
    %v457 = vmul.f32 %v340, %v453
    %v458 = vmul.f32 %v343, %v453
    %v459 = vmul.f32 %v348, %v453
    %v460 = vmul.f32 %v351, %v453
    %v461 = vmul.f32 %v356, %v453
    %v462 = vmul.f32 %v359, %v453
    %v463 = vmul.f32 %v364, %v453
    %v464 = vmul.f32 %v367, %v453
    %v465 = vmul.f32 %v372, %v453
    %v466 = vmul.f32 %v375, %v453
    %v467 = vmul.f32 %v380, %v453
    %v468 = vmul.f32 %v383, %v453
    %v470 = vlaneseq
    %v471 = vshrl.u32 %v470, 7
    %v472 = vsub.s32 0, %v471
    %v473 = vrot.slane %v448, %v472
    %v475 = vadd.f32 %v455, %v473
    %v476 = vadd.f32 %v456, %v473
    %v477 = vadd.f32 %v457, %v473
    %v478 = vadd.f32 %v458, %v473
    %v479 = vadd.f32 %v459, %v473
    %v480 = vadd.f32 %v460, %v473
    %v481 = vadd.f32 %v461, %v473
    %v482 = vadd.f32 %v462, %v473
    %v483 = vadd.f32 %v463, %v473
    %v484 = vadd.f32 %v464, %v473
    %v485 = vadd.f32 %v465, %v473
    %v486 = vadd.f32 %v466, %v473
    %v487 = vadd.f32 %v467, %v473
    %v488 = vadd.f32 %v468, %v473
    %489 = vst [vmem:[#allocation8] sm:$0xff] %v475
    %490 = vst [vmem:[#allocation8 + $0x8] sm:$0xff] %v476
    %491 = vst [vmem:[#allocation8 + $0x10] sm:$0xff] %v477
    %492 = vst [vmem:[#allocation8 + $0x18] sm:$0xff] %v478
    %493 = vst [vmem:[#allocation8 + $0x20] sm:$0xff] %v479
    %494 = vst [vmem:[#allocation8 + $0x28] sm:$0xff] %v480
    %495 = vst [vmem:[#allocation8 + $0x30] sm:$0xff] %v481
    %496 = vst [vmem:[#allocation8 + $0x38] sm:$0xff] %v482
    %497 = vst [vmem:[#allocation8 + $0x40] sm:$0xff] %v483
    %498 = vst [vmem:[#allocation8 + $0x48] sm:$0xff] %v484
    %499 = vst [vmem:[#allocation8 + $0x50] sm:$0xff] %v485
    %500 = vst [vmem:[#allocation8 + $0x58] sm:$0xff] %v486
    %501 = vst [vmem:[#allocation8 + $0x60] sm:$0xff] %v487
    %502 = vst [vmem:[#allocation8 + $0x68] sm:$0xff] %v488
    // Predicated region
    $region34: #{tpu_custom_call.1} parent=1 // pred_check
      _
    $region35: #{tpu_custom_call.1} parent=1 // pred_check_branch
      %504 = sbr.rel (0) target = $region37
    $region36: #{tpu_custom_call.1} parent=1 // pred_region
      %s506 = ssub.s32 1792, 1792
      %507 = vsyncadd [#allocation4], %s506
      %s508 = sshll.u32 [#allocation8], 4
      %s509 = int_to_ptr.vmem [resolvable:$true] %s508
      %514 = dma.vmem_to_hbm [thread:$0]  %s509, 1792, %s5, [#allocation4], 128, 128, 8
    $region37: #{tpu_custom_call.1} parent=1 // pred_fallthru
      _
    // Predicated region
    $region38: #{tpu_custom_call.1} parent=1 // pred_check
      _
    $region39: #{tpu_custom_call.1} parent=1 // pred_check_branch
      %516 = sbr.rel (0) target = $region41
    $region40: #{tpu_custom_call.1} parent=1 // pred_region
      %517 = dma.done [#allocation4], 1792
    $region41: #{tpu_custom_call.1} parent=1 // pred_fallthru
      _
    %518 = vsyncpa [#allocation3], 1
    %519 = vsyncpa [#allocation6], 1
    %520 = vsyncpa [#allocation4], 1

</llo_original>
